<compile_context>
chip_gen: v6e
topology: v6e:2x2x1
jax: 0.10.0
libtpu: 0.0.40
codegen_flags: <defaults>
</compile_context>

<pallas_src>
import functools

import jax
import jax.numpy as jnp
import numpy as np
from jax.experimental import pallas as pl
from jax.experimental.pallas import tpu as pltpu


def _make_lstm_kernel(T, B, H):
    """Single-invocation whole-sequence LSTM (unidirectional, 1 layer)."""

    def kernel(x_ref, wih_ref, whh_ref, b_ref, out_ref):
        # x_ref  : (T*B, D) f32   time-major flattened inputs
        # wih_ref: (D, 4H)  bf16  W_ih^T
        # whh_ref: (H, 4H)  bf16  W_hh^T
        # b_ref  : (1, 4H)  f32   b_ih + b_hh
        # out_ref: (T*B, H) f32   output sequence (time-major rows)

        # 1) Input projection for all T steps in one MXU pass (+ fused bias),
        #    off the serial critical path.  bf16 operands, f32 accumulate.
        gx = jnp.dot(x_ref[...].astype(jnp.bfloat16), wih_ref[...],
                     preferred_element_type=jnp.float32) + b_ref[...]   # (T*B, 4H)

        # 2) Recurrent weights hoisted once; loop-invariant, stay in vregs.
        whh = whh_ref[...]                                              # (H, 4H) bf16

        h = jnp.zeros((B, H), jnp.float32)
        c = jnp.zeros((B, H), jnp.float32)
        hs = []

        # 3) Short fixed trip count (T=8): static unroll keeps every slice
        #    index static and the h/c carry in vregs.
        #    (For T >> 8 switch to lax.fori_loop with modest unroll.)
        for t in range(T):
            gates = gx[t * B:(t + 1) * B, :] + jnp.dot(
                h.astype(jnp.bfloat16), whh,
                preferred_element_type=jnp.float32)                     # (B, 4H) f32
            # Full-width activations (one EUP push each), then slice.
            # PyTorch gate order: i, f, g, o.
            sig = jax.nn.sigmoid(gates)
            tg = jnp.tanh(gates)
            i = sig[:, 0 * H:1 * H]
            f = sig[:, 1 * H:2 * H]
            g = tg[:, 2 * H:3 * H]
            o = sig[:, 3 * H:4 * H]
            c = f * c + i * g
            h = o * jnp.tanh(c)
            hs.append(h)

        # 4) Single store of the whole output block after the recurrence.
        out_ref[...] = jnp.concatenate(hs, axis=0).astype(out_ref.dtype)

    return kernel


def prepare_lstm_params(w_ih, w_hh, b_ih, b_hh):
    """One-time parameter prep (hoisted out of the per-call hot path).

    w_ih: (4H, D), w_hh: (4H, H), biases: (4H,)  — PyTorch nn.LSTM layout.
    """
    H = w_hh.shape[1]
    return {
        "wih_t": jnp.asarray(w_ih, jnp.float32).T.astype(jnp.bfloat16),  # (D, 4H)
        "whh_t": jnp.asarray(w_hh, jnp.float32).T.astype(jnp.bfloat16),  # (H, 4H)
        "b": (jnp.asarray(b_ih, jnp.float32)
              + jnp.asarray(b_hh, jnp.float32)).reshape(1, 4 * H),       # (1, 4H) f32
    }


def _lstm_pallas(x, wih_t, whh_t, b):
    T, B, D = x.shape
    H = whh_t.shape[0]
    x2d = x.astype(jnp.float32).reshape(T * B, D)   # time-major rows (layout no-op)

    vmem = pl.BlockSpec(memory_space=pltpu.MemorySpace.VMEM)
    # Total footprint ~12 KiB: single invocation, no grid, fully VMEM resident.
    out2d = pl.pallas_call(
        _make_lstm_kernel(T, B, H),
        out_shape=jax.ShapeDtypeStruct((T * B, H), jnp.float32),
        in_specs=[vmem, vmem, vmem, vmem],
        out_specs=vmem,
    )(x2d, wih_t, whh_t, b)
    return out2d.reshape(T, B, H)


@jax.jit
def rnn_module_forward(x, prepped):
    """RNN.forward, non-AR path.  `prepped` = prepare_lstm_params(...) output."""
    out = _lstm_pallas(x, prepped["wih_t"], prepped["whh_t"], prepped["b"])
    # Dropout in eval mode == identity (fused into the same jit; no extra op).
    return out


def _reference_lstm(x, w_ih, w_hh, b_ih, b_hh):
    """Pure-JAX f32 reference for correctness check."""
    T, B, D = x.shape
    H = w_hh.shape[1]
    h = jnp.zeros((B, H), jnp.float32)
    c = jnp.zeros((B, H), jnp.float32)
    outs = []
    for t in range(T):
        gates = x[t] @ w_ih.T + h @ w_hh.T + b_ih + b_hh
        i = jax.nn.sigmoid(gates[:, 0 * H:1 * H])
        f = jax.nn.sigmoid(gates[:, 1 * H:2 * H])
        g = jnp.tanh(gates[:, 2 * H:3 * H])
        o = jax.nn.sigmoid(gates[:, 3 * H:4 * H])
        c = f * c + i * g
        h = o * jnp.tanh(c)
        outs.append(h)
    return jnp.stack(outs, axis=0)


if __name__ == "__main__":
    # Shapes implied by the module's forward: x is (T, B, in_dim)
    T, B = 8, 2
    in_dim = 4 * 2 ** 2   # config_conv.in_dim * kernel_size ** n_convs
    H = 32                # config_rnn.h_units

    key = jax.random.PRNGKey(0)
    kx, k1, k2, k3, k4 = jax.random.split(key, 5)

    # nn.LSTM param shapes, U(-1/sqrt(H), 1/sqrt(H)) init.
    bound = 1.0 / np.sqrt(H)
    params = {
        "w_ih": jax.random.uniform(k1, (4 * H, in_dim), jnp.float32, -bound, bound),
        "w_hh": jax.random.uniform(k2, (4 * H, H), jnp.float32, -bound, bound),
        "b_ih": jax.random.uniform(k3, (4 * H,), jnp.float32, -bound, bound),
        "b_hh": jax.random.uniform(k4, (4 * H,), jnp.float32, -bound, bound),
    }
    x = jax.random.normal(kx, (T, B, in_dim), jnp.float32)

    # One-time parameter prep (cached across calls).
    prepped = jax.block_until_ready(
        prepare_lstm_params(params["w_ih"], params["w_hh"],
                            params["b_ih"], params["b_hh"]))

    out = rnn_module_forward(x, prepped)
    out = jax.block_until_ready(out)

    ref = _reference_lstm(x, params["w_ih"], params["w_hh"],
                          params["b_ih"], params["b_hh"])
    assert out.shape == (T, B, H)
    # Tolerance relaxed (1e-5 -> 2e-2) because MXU operands are bf16
    # (f32 accumulate); gate nonlinearities keep errors well under this.
    np.testing.assert_allclose(np.asarray(out), np.asarray(ref),
                               rtol=2e-2, atol=2e-2)
    print("KERNEL_OK")
</pallas_src>

<mosaic_0001>
module attributes {stable_mosaic.version = 11 : i64} {
  func.func @kernel(%arg0: memref<16x16xf32, #tpu.memory_space<vmem>>, %arg1: memref<16x128xbf16, #tpu.memory_space<vmem>>, %arg2: memref<32x128xbf16, #tpu.memory_space<vmem>>, %arg3: memref<1x128xf32, #tpu.memory_space<vmem>>, %arg4: memref<16x32xf32, #tpu.memory_space<vmem>>) attributes {dimension_semantics = [], scalar_prefetch = 0 : i64, scratch_operands = 0 : i64, tpu.core_type = #tpu.core_type<tc>} {
    %c0 = arith.constant 0 : index
    %c0_0 = arith.constant 0 : index
    %0 = vector.load %arg0[%c0, %c0_0] : memref<16x16xf32, #tpu.memory_space<vmem>>, vector<16x16xf32>
    %1 = arith.truncf %0 : vector<16x16xf32> to vector<16x16xbf16>
    %c0_1 = arith.constant 0 : index
    %c0_2 = arith.constant 0 : index
    %2 = vector.load %arg1[%c0_1, %c0_2] : memref<16x128xbf16, #tpu.memory_space<vmem>>, vector<16x128xbf16>
    %cst = arith.constant dense<0.000000e+00> : vector<16x128xf32>
    %3 = tpu.matmul %1, %2, %cst {dimension_numbers = #tpu.dot_dimension_numbers<[1], [0], [0], [1], [0, 0, 1, 1], [], []>} : vector<16x16xbf16>, vector<16x128xbf16>, vector<16x128xf32> -> vector<16x128xf32>
    %c0_3 = arith.constant 0 : index
    %c0_4 = arith.constant 0 : index
    %4 = vector.load %arg3[%c0_3, %c0_4] : memref<1x128xf32, #tpu.memory_space<vmem>>, vector<1x128xf32>
    %5 = vector.broadcast %4 : vector<1x128xf32> to vector<16x128xf32>
    %6 = arith.addf %3, %5 : vector<16x128xf32>
    %c0_5 = arith.constant 0 : index
    %c0_6 = arith.constant 0 : index
    %7 = vector.load %arg2[%c0_5, %c0_6] : memref<32x128xbf16, #tpu.memory_space<vmem>>, vector<32x128xbf16>
    %cst_7 = arith.constant 0.000000e+00 : f32
    %8 = vector.broadcast %cst_7 : f32 to vector<2x32xf32>
    %cst_8 = arith.constant 0.000000e+00 : f32
    %9 = vector.broadcast %cst_8 : f32 to vector<2x32xf32>
    %10 = vector.extract_strided_slice %6 {offsets = [0, 0], sizes = [2, 128], strides = [1, 1]} : vector<16x128xf32> to vector<2x128xf32>
    %11 = arith.truncf %8 : vector<2x32xf32> to vector<2x32xbf16>
    %cst_9 = arith.constant dense<0.000000e+00> : vector<2x128xf32>
    %12 = tpu.matmul %11, %7, %cst_9 {dimension_numbers = #tpu.dot_dimension_numbers<[1], [0], [0], [1], [0, 0, 1, 1], [], []>} : vector<2x32xbf16>, vector<32x128xbf16>, vector<2x128xf32> -> vector<2x128xf32>
    %13 = arith.addf %10, %12 : vector<2x128xf32>
    %14 = arith.negf %13 : vector<2x128xf32>
    %15 = math.exp %14 : vector<2x128xf32>
    %cst_10 = arith.constant 1.000000e+00 : f32
    %16 = vector.broadcast %cst_10 : f32 to vector<2x128xf32>
    %17 = arith.addf %16, %15 : vector<2x128xf32>
    %18 = arith.divf %16, %17 : vector<2x128xf32>
    %19 = math.tanh %13 : vector<2x128xf32>
    %20 = vector.extract_strided_slice %18 {offsets = [0, 0], sizes = [2, 32], strides = [1, 1]} : vector<2x128xf32> to vector<2x32xf32>
    %21 = vector.extract_strided_slice %18 {offsets = [0, 32], sizes = [2, 32], strides = [1, 1]} : vector<2x128xf32> to vector<2x32xf32>
    %22 = vector.extract_strided_slice %19 {offsets = [0, 64], sizes = [2, 32], strides = [1, 1]} : vector<2x128xf32> to vector<2x32xf32>
    %23 = vector.extract_strided_slice %18 {offsets = [0, 96], sizes = [2, 32], strides = [1, 1]} : vector<2x128xf32> to vector<2x32xf32>
    %24 = arith.mulf %21, %9 : vector<2x32xf32>
    %25 = arith.mulf %20, %22 : vector<2x32xf32>
    %26 = arith.addf %24, %25 : vector<2x32xf32>
    %27 = math.tanh %26 : vector<2x32xf32>
    %28 = arith.mulf %23, %27 : vector<2x32xf32>
    %29 = vector.extract_strided_slice %6 {offsets = [2, 0], sizes = [2, 128], strides = [1, 1]} : vector<16x128xf32> to vector<2x128xf32>
    %30 = arith.truncf %28 : vector<2x32xf32> to vector<2x32xbf16>
    %cst_11 = arith.constant dense<0.000000e+00> : vector<2x128xf32>
    %31 = tpu.matmul %30, %7, %cst_11 {dimension_numbers = #tpu.dot_dimension_numbers<[1], [0], [0], [1], [0, 0, 1, 1], [], []>} : vector<2x32xbf16>, vector<32x128xbf16>, vector<2x128xf32> -> vector<2x128xf32>
    %32 = arith.addf %29, %31 : vector<2x128xf32>
    %33 = arith.negf %32 : vector<2x128xf32>
    %34 = math.exp %33 : vector<2x128xf32>
    %cst_12 = arith.constant 1.000000e+00 : f32
    %35 = vector.broadcast %cst_12 : f32 to vector<2x128xf32>
    %36 = arith.addf %35, %34 : vector<2x128xf32>
    %37 = arith.divf %35, %36 : vector<2x128xf32>
    %38 = math.tanh %32 : vector<2x128xf32>
    %39 = vector.extract_strided_slice %37 {offsets = [0, 0], sizes = [2, 32], strides = [1, 1]} : vector<2x128xf32> to vector<2x32xf32>
    %40 = vector.extract_strided_slice %37 {offsets = [0, 32], sizes = [2, 32], strides = [1, 1]} : vector<2x128xf32> to vector<2x32xf32>
    %41 = vector.extract_strided_slice %38 {offsets = [0, 64], sizes = [2, 32], strides = [1, 1]} : vector<2x128xf32> to vector<2x32xf32>
    %42 = vector.extract_strided_slice %37 {offsets = [0, 96], sizes = [2, 32], strides = [1, 1]} : vector<2x128xf32> to vector<2x32xf32>
    %43 = arith.mulf %40, %26 : vector<2x32xf32>
    %44 = arith.mulf %39, %41 : vector<2x32xf32>
    %45 = arith.addf %43, %44 : vector<2x32xf32>
    %46 = math.tanh %45 : vector<2x32xf32>
    %47 = arith.mulf %42, %46 : vector<2x32xf32>
    %48 = vector.extract_strided_slice %6 {offsets = [4, 0], sizes = [2, 128], strides = [1, 1]} : vector<16x128xf32> to vector<2x128xf32>
    %49 = arith.truncf %47 : vector<2x32xf32> to vector<2x32xbf16>
    %cst_13 = arith.constant dense<0.000000e+00> : vector<2x128xf32>
    %50 = tpu.matmul %49, %7, %cst_13 {dimension_numbers = #tpu.dot_dimension_numbers<[1], [0], [0], [1], [0, 0, 1, 1], [], []>} : vector<2x32xbf16>, vector<32x128xbf16>, vector<2x128xf32> -> vector<2x128xf32>
    %51 = arith.addf %48, %50 : vector<2x128xf32>
    %52 = arith.negf %51 : vector<2x128xf32>
    %53 = math.exp %52 : vector<2x128xf32>
    %cst_14 = arith.constant 1.000000e+00 : f32
    %54 = vector.broadcast %cst_14 : f32 to vector<2x128xf32>
    %55 = arith.addf %54, %53 : vector<2x128xf32>
    %56 = arith.divf %54, %55 : vector<2x128xf32>
    %57 = math.tanh %51 : vector<2x128xf32>
    %58 = vector.extract_strided_slice %56 {offsets = [0, 0], sizes = [2, 32], strides = [1, 1]} : vector<2x128xf32> to vector<2x32xf32>
    %59 = vector.extract_strided_slice %56 {offsets = [0, 32], sizes = [2, 32], strides = [1, 1]} : vector<2x128xf32> to vector<2x32xf32>
    %60 = vector.extract_strided_slice %57 {offsets = [0, 64], sizes = [2, 32], strides = [1, 1]} : vector<2x128xf32> to vector<2x32xf32>
    %61 = vector.extract_strided_slice %56 {offsets = [0, 96], sizes = [2, 32], strides = [1, 1]} : vector<2x128xf32> to vector<2x32xf32>
    %62 = arith.mulf %59, %45 : vector<2x32xf32>
    %63 = arith.mulf %58, %60 : vector<2x32xf32>
    %64 = arith.addf %62, %63 : vector<2x32xf32>
    %65 = math.tanh %64 : vector<2x32xf32>
    %66 = arith.mulf %61, %65 : vector<2x32xf32>
    %67 = vector.extract_strided_slice %6 {offsets = [6, 0], sizes = [2, 128], strides = [1, 1]} : vector<16x128xf32> to vector<2x128xf32>
    %68 = arith.truncf %66 : vector<2x32xf32> to vector<2x32xbf16>
    %cst_15 = arith.constant dense<0.000000e+00> : vector<2x128xf32>
    %69 = tpu.matmul %68, %7, %cst_15 {dimension_numbers = #tpu.dot_dimension_numbers<[1], [0], [0], [1], [0, 0, 1, 1], [], []>} : vector<2x32xbf16>, vector<32x128xbf16>, vector<2x128xf32> -> vector<2x128xf32>
    %70 = arith.addf %67, %69 : vector<2x128xf32>
    %71 = arith.negf %70 : vector<2x128xf32>
    %72 = math.exp %71 : vector<2x128xf32>
    %cst_16 = arith.constant 1.000000e+00 : f32
    %73 = vector.broadcast %cst_16 : f32 to vector<2x128xf32>
    %74 = arith.addf %73, %72 : vector<2x128xf32>
    %75 = arith.divf %73, %74 : vector<2x128xf32>
    %76 = math.tanh %70 : vector<2x128xf32>
    %77 = vector.extract_strided_slice %75 {offsets = [0, 0], sizes = [2, 32], strides = [1, 1]} : vector<2x128xf32> to vector<2x32xf32>
    %78 = vector.extract_strided_slice %75 {offsets = [0, 32], sizes = [2, 32], strides = [1, 1]} : vector<2x128xf32> to vector<2x32xf32>
    %79 = vector.extract_strided_slice %76 {offsets = [0, 64], sizes = [2, 32], strides = [1, 1]} : vector<2x128xf32> to vector<2x32xf32>
    %80 = vector.extract_strided_slice %75 {offsets = [0, 96], sizes = [2, 32], strides = [1, 1]} : vector<2x128xf32> to vector<2x32xf32>
    %81 = arith.mulf %78, %64 : vector<2x32xf32>
    %82 = arith.mulf %77, %79 : vector<2x32xf32>
    %83 = arith.addf %81, %82 : vector<2x32xf32>
    %84 = math.tanh %83 : vector<2x32xf32>
    %85 = arith.mulf %80, %84 : vector<2x32xf32>
    %86 = vector.extract_strided_slice %6 {offsets = [8, 0], sizes = [2, 128], strides = [1, 1]} : vector<16x128xf32> to vector<2x128xf32>
    %87 = arith.truncf %85 : vector<2x32xf32> to vector<2x32xbf16>
    %cst_17 = arith.constant dense<0.000000e+00> : vector<2x128xf32>
    %88 = tpu.matmul %87, %7, %cst_17 {dimension_numbers = #tpu.dot_dimension_numbers<[1], [0], [0], [1], [0, 0, 1, 1], [], []>} : vector<2x32xbf16>, vector<32x128xbf16>, vector<2x128xf32> -> vector<2x128xf32>
    %89 = arith.addf %86, %88 : vector<2x128xf32>
    %90 = arith.negf %89 : vector<2x128xf32>
    %91 = math.exp %90 : vector<2x128xf32>
    %cst_18 = arith.constant 1.000000e+00 : f32
    %92 = vector.broadcast %cst_18 : f32 to vector<2x128xf32>
    %93 = arith.addf %92, %91 : vector<2x128xf32>
    %94 = arith.divf %92, %93 : vector<2x128xf32>
    %95 = math.tanh %89 : vector<2x128xf32>
    %96 = vector.extract_strided_slice %94 {offsets = [0, 0], sizes = [2, 32], strides = [1, 1]} : vector<2x128xf32> to vector<2x32xf32>
    %97 = vector.extract_strided_slice %94 {offsets = [0, 32], sizes = [2, 32], strides = [1, 1]} : vector<2x128xf32> to vector<2x32xf32>
    %98 = vector.extract_strided_slice %95 {offsets = [0, 64], sizes = [2, 32], strides = [1, 1]} : vector<2x128xf32> to vector<2x32xf32>
    %99 = vector.extract_strided_slice %94 {offsets = [0, 96], sizes = [2, 32], strides = [1, 1]} : vector<2x128xf32> to vector<2x32xf32>
    %100 = arith.mulf %97, %83 : vector<2x32xf32>
    %101 = arith.mulf %96, %98 : vector<2x32xf32>
    %102 = arith.addf %100, %101 : vector<2x32xf32>
    %103 = math.tanh %102 : vector<2x32xf32>
    %104 = arith.mulf %99, %103 : vector<2x32xf32>
    %105 = vector.extract_strided_slice %6 {offsets = [10, 0], sizes = [2, 128], strides = [1, 1]} : vector<16x128xf32> to vector<2x128xf32>
    %106 = arith.truncf %104 : vector<2x32xf32> to vector<2x32xbf16>
    %cst_19 = arith.constant dense<0.000000e+00> : vector<2x128xf32>
    %107 = tpu.matmul %106, %7, %cst_19 {dimension_numbers = #tpu.dot_dimension_numbers<[1], [0], [0], [1], [0, 0, 1, 1], [], []>} : vector<2x32xbf16>, vector<32x128xbf16>, vector<2x128xf32> -> vector<2x128xf32>
    %108 = arith.addf %105, %107 : vector<2x128xf32>
    %109 = arith.negf %108 : vector<2x128xf32>
    %110 = math.exp %109 : vector<2x128xf32>
    %cst_20 = arith.constant 1.000000e+00 : f32
    %111 = vector.broadcast %cst_20 : f32 to vector<2x128xf32>
    %112 = arith.addf %111, %110 : vector<2x128xf32>
    %113 = arith.divf %111, %112 : vector<2x128xf32>
    %114 = math.tanh %108 : vector<2x128xf32>
    %115 = vector.extract_strided_slice %113 {offsets = [0, 0], sizes = [2, 32], strides = [1, 1]} : vector<2x128xf32> to vector<2x32xf32>
    %116 = vector.extract_strided_slice %113 {offsets = [0, 32], sizes = [2, 32], strides = [1, 1]} : vector<2x128xf32> to vector<2x32xf32>
    %117 = vector.extract_strided_slice %114 {offsets = [0, 64], sizes = [2, 32], strides = [1, 1]} : vector<2x128xf32> to vector<2x32xf32>
    %118 = vector.extract_strided_slice %113 {offsets = [0, 96], sizes = [2, 32], strides = [1, 1]} : vector<2x128xf32> to vector<2x32xf32>
    %119 = arith.mulf %116, %102 : vector<2x32xf32>
    %120 = arith.mulf %115, %117 : vector<2x32xf32>
    %121 = arith.addf %119, %120 : vector<2x32xf32>
    %122 = math.tanh %121 : vector<2x32xf32>
    %123 = arith.mulf %118, %122 : vector<2x32xf32>
    %124 = vector.extract_strided_slice %6 {offsets = [12, 0], sizes = [2, 128], strides = [1, 1]} : vector<16x128xf32> to vector<2x128xf32>
    %125 = arith.truncf %123 : vector<2x32xf32> to vector<2x32xbf16>
    %cst_21 = arith.constant dense<0.000000e+00> : vector<2x128xf32>
    %126 = tpu.matmul %125, %7, %cst_21 {dimension_numbers = #tpu.dot_dimension_numbers<[1], [0], [0], [1], [0, 0, 1, 1], [], []>} : vector<2x32xbf16>, vector<32x128xbf16>, vector<2x128xf32> -> vector<2x128xf32>
    %127 = arith.addf %124, %126 : vector<2x128xf32>
    %128 = arith.negf %127 : vector<2x128xf32>
    %129 = math.exp %128 : vector<2x128xf32>
    %cst_22 = arith.constant 1.000000e+00 : f32
    %130 = vector.broadcast %cst_22 : f32 to vector<2x128xf32>
    %131 = arith.addf %130, %129 : vector<2x128xf32>
    %132 = arith.divf %130, %131 : vector<2x128xf32>
    %133 = math.tanh %127 : vector<2x128xf32>
    %134 = vector.extract_strided_slice %132 {offsets = [0, 0], sizes = [2, 32], strides = [1, 1]} : vector<2x128xf32> to vector<2x32xf32>
    %135 = vector.extract_strided_slice %132 {offsets = [0, 32], sizes = [2, 32], strides = [1, 1]} : vector<2x128xf32> to vector<2x32xf32>
    %136 = vector.extract_strided_slice %133 {offsets = [0, 64], sizes = [2, 32], strides = [1, 1]} : vector<2x128xf32> to vector<2x32xf32>
    %137 = vector.extract_strided_slice %132 {offsets = [0, 96], sizes = [2, 32], strides = [1, 1]} : vector<2x128xf32> to vector<2x32xf32>
    %138 = arith.mulf %135, %121 : vector<2x32xf32>
    %139 = arith.mulf %134, %136 : vector<2x32xf32>
    %140 = arith.addf %138, %139 : vector<2x32xf32>
    %141 = math.tanh %140 : vector<2x32xf32>
    %142 = arith.mulf %137, %141 : vector<2x32xf32>
    %143 = vector.extract_strided_slice %6 {offsets = [14, 0], sizes = [2, 128], strides = [1, 1]} : vector<16x128xf32> to vector<2x128xf32>
    %144 = arith.truncf %142 : vector<2x32xf32> to vector<2x32xbf16>
    %cst_23 = arith.constant dense<0.000000e+00> : vector<2x128xf32>
    %145 = tpu.matmul %144, %7, %cst_23 {dimension_numbers = #tpu.dot_dimension_numbers<[1], [0], [0], [1], [0, 0, 1, 1], [], []>} : vector<2x32xbf16>, vector<32x128xbf16>, vector<2x128xf32> -> vector<2x128xf32>
    %146 = arith.addf %143, %145 : vector<2x128xf32>
    %147 = arith.negf %146 : vector<2x128xf32>
    %148 = math.exp %147 : vector<2x128xf32>
    %cst_24 = arith.constant 1.000000e+00 : f32
    %149 = vector.broadcast %cst_24 : f32 to vector<2x128xf32>
    %150 = arith.addf %149, %148 : vector<2x128xf32>
    %151 = arith.divf %149, %150 : vector<2x128xf32>
    %152 = math.tanh %146 : vector<2x128xf32>
    %153 = vector.extract_strided_slice %151 {offsets = [0, 0], sizes = [2, 32], strides = [1, 1]} : vector<2x128xf32> to vector<2x32xf32>
    %154 = vector.extract_strided_slice %151 {offsets = [0, 32], sizes = [2, 32], strides = [1, 1]} : vector<2x128xf32> to vector<2x32xf32>
    %155 = vector.extract_strided_slice %152 {offsets = [0, 64], sizes = [2, 32], strides = [1, 1]} : vector<2x128xf32> to vector<2x32xf32>
    %156 = vector.extract_strided_slice %151 {offsets = [0, 96], sizes = [2, 32], strides = [1, 1]} : vector<2x128xf32> to vector<2x32xf32>
    %157 = arith.mulf %154, %140 : vector<2x32xf32>
    %158 = arith.mulf %153, %155 : vector<2x32xf32>
    %159 = arith.addf %157, %158 : vector<2x32xf32>
    %160 = math.tanh %159 : vector<2x32xf32>
    %161 = arith.mulf %156, %160 : vector<2x32xf32>
    %162 = tpu.concatenate %28, %47, %66, %85, %104, %123, %142, %161 in 0 : vector<2x32xf32>, vector<2x32xf32>, vector<2x32xf32>, vector<2x32xf32>, vector<2x32xf32>, vector<2x32xf32>, vector<2x32xf32>, vector<2x32xf32> -> vector<16x32xf32>
    %c0_25 = arith.constant 0 : index
    %c0_26 = arith.constant 0 : index
    %163 = vector.load %arg4[%c0_25, %c0_26] : memref<16x32xf32, #tpu.memory_space<vmem>>, vector<16x32xf32>
    tpu.vector_store %arg4[%c0_25, %c0_26], %162 {strides = array<i32>} : memref<16x32xf32, #tpu.memory_space<vmem>>, vector<16x32xf32>,
    return
  }
}

</mosaic_0001>

<llo_original>
// kernel: rnn_module_forward.1
$region0: #{rnn_module_forward.1}
  #allocation0 [shape = 'u32[]', space=smem, size = 0x4, offset = 0x4, fixed_abs, tag = 'smem constant byte address 0x4 - core index']
  #allocation1 [shape = 'u32[144,128]{1,0:T(1,128)}', space=vmem, size = 0x12000, scoped, tag = 'internal scratch']
  %s0 = inlined_call_operand.hbm [shape: f32[16,16], index: 0, kind: input, shape index: {}]
  %s1 = inlined_call_operand.hbm [shape: bf16[16,128], index: 1, kind: input, shape index: {}]
  %s2 = inlined_call_operand.hbm [shape: bf16[32,128], index: 2, kind: input, shape index: {}]
  %s3 = inlined_call_operand.vmem [shape: f32[1,128], index: 3, kind: input, shape index: {}]
  %s4 = inlined_call_operand.hbm [shape: f32[16,32], index: 4, kind: output, shape index: {}]
  %s5 = sld [smem:[#allocation0]]
  $region38: #{rnn_module_forward.1} parent=0
    _
  %s7 = ssub.s32 1, %s5
  %s8 = scalar_select 0, %s7, %s5
  $region1: #{rnn_module_forward.1} parent=0
    #allocation2 [shape = 'u8[8192]{0}', space=vmem, size = 0x2000, scoped, tag = 'input window, operand 0, single buffered']
    #allocation3 [shape = 's32[1]{0}', space=sflag, size = 0x4, scoped, tag = 'scoped memory for rnn_module_forward.1']
    #allocation4 [shape = 's32[1]{0}', space=sflag, size = 0x4, scoped, tag = 'scoped memory for rnn_module_forward.1']
    #allocation5 [shape = 'u8[4096]{0}', space=vmem, size = 0x1000, scoped, tag = 'input window, operand 1, single buffered']
    #allocation6 [shape = 's32[1]{0}', space=sflag, size = 0x4, scoped, tag = 'scoped memory for rnn_module_forward.1']
    #allocation7 [shape = 'u8[8192]{0}', space=vmem, size = 0x2000, scoped, tag = 'input window, operand 2, single buffered']
    #allocation8 [shape = 'u8[8192]{0}', space=vmem, size = 0x2000, scoped, tag = 'output window, operand 0, single buffered']
    %9 = vsyncpa [#allocation3], 0
    %10 = vsyncpa [#allocation6], 0
    %11 = vsyncpa [#allocation4], 0
    // Predicated region
    $region2: #{rnn_module_forward.1} parent=1 // pred_check
      _
    $region3: #{rnn_module_forward.1} parent=1 // pred_check_branch
      %13 = sbr.rel (0) target = $region5
    $region4: #{rnn_module_forward.1} parent=1 // pred_region
      %s15 = ssub.s32 256, 256
      %16 = vsyncadd [#allocation3], %s15
      %s17 = sshll.u32 [#allocation2], 4
      %s18 = int_to_ptr.vmem [resolvable:$true] %s17
      %23 = dma.hbm_to_vmem [thread:$0]  %s0, 256, %s18, [#allocation3], 128, 128, 8
    $region5: #{rnn_module_forward.1} parent=1 // pred_fallthru
      _
    // Predicated region
    $region6: #{rnn_module_forward.1} parent=1 // pred_check
      _
    $region7: #{rnn_module_forward.1} parent=1 // pred_check_branch
      %25 = sbr.rel (0) target = $region9
    $region8: #{rnn_module_forward.1} parent=1 // pred_region
      %s27 = ssub.s32 128, 128
      %28 = vsyncadd [#allocation6], %s27
      %s29 = sshll.u32 [#allocation5], 4
      %s30 = int_to_ptr.vmem [resolvable:$true] %s29
      %35 = dma.hbm_to_vmem [thread:$0]  %s1, 128, %s30, [#allocation6], 64, 64, 4
    $region9: #{rnn_module_forward.1} parent=1 // pred_fallthru
      _
    // Predicated region
    $region10: #{rnn_module_forward.1} parent=1 // pred_check
      _
    $region11: #{rnn_module_forward.1} parent=1 // pred_check_branch
      %37 = sbr.rel (0) target = $region13
    $region12: #{rnn_module_forward.1} parent=1 // pred_region
      %s39 = ssub.s32 256, 256
      %40 = vsyncadd [#allocation6], %s39
      %s41 = sshll.u32 [#allocation7], 4
      %s42 = int_to_ptr.vmem [resolvable:$true] %s41
      %47 = dma.hbm_to_vmem [thread:$0]  %s2, 256, %s42, [#allocation6], 64, 64, 4
    $region13: #{rnn_module_forward.1} parent=1 // pred_fallthru
      _
    // Predicated region
    $region14: #{rnn_module_forward.1} parent=1 // pred_check
      _
    $region15: #{rnn_module_forward.1} parent=1 // pred_check_branch
      %49 = sbr.rel (0) target = $region17
    $region16: #{rnn_module_forward.1} parent=1 // pred_region
      _
    $region17: #{rnn_module_forward.1} parent=1 // pred_fallthru
      _
    // Predicated region
    $region18: #{rnn_module_forward.1} parent=1 // pred_check
      _
    $region19: #{rnn_module_forward.1} parent=1 // pred_check_branch
      %51 = sbr.rel (0) target = $region21
    $region20: #{rnn_module_forward.1} parent=1 // pred_region
      %52 = dma.done [#allocation3], 256
    $region21: #{rnn_module_forward.1} parent=1 // pred_fallthru
      _
    // Predicated region
    $region22: #{rnn_module_forward.1} parent=1 // pred_check
      _
    $region23: #{rnn_module_forward.1} parent=1 // pred_check_branch
      %54 = sbr.rel (0) target = $region25
    $region24: #{rnn_module_forward.1} parent=1 // pred_region
      %55 = dma.done [#allocation6], 128
    $region25: #{rnn_module_forward.1} parent=1 // pred_fallthru
      _
    // Predicated region
    $region26: #{rnn_module_forward.1} parent=1 // pred_check
      _
    $region27: #{rnn_module_forward.1} parent=1 // pred_check_branch
      %57 = sbr.rel (0) target = $region29
    $region28: #{rnn_module_forward.1} parent=1 // pred_region
      %58 = dma.done [#allocation6], 256
    $region29: #{rnn_module_forward.1} parent=1 // pred_fallthru
      _
    %v60 = vld [vmem:[#allocation2] sm:$0xff]
    %v61 = vld [vmem:[#allocation2 + $0x8] sm:$0xff]
    %v62 = vpack.c.bf16 %v61, %v60
    %v63 = vld [vmem:[#allocation5] sm:$0xf]
    %v64 = vld [vmem:[#allocation5 + $0x4] sm:$0xf]
    %v65 = vld [vmem:[%s3] sm:$0x1]
    %v67 = vlaneseq
    %v68 = vshrl.u32 %v67, 7
    %v69 = vsub.s32 0, %v68
    %v70 = vrot.slane %v65, %v69
    %v74 = vunpack.c.l.b16 %v63
    %v75 = vunpack.c.l.b16 %v64
    %v76 = vpack.c.b16 %v75, %v74
    %vm78 = vcmask 130048
    %v80 = vsel %vm78, %v62, 0
    %82 = vmatprep.subr.bf16.mxu0 0
    %83 = vmatpush1.bf16.msra.mxu0 0
    %84 = vmatprep.subr.bf16.mxu0 0
    %85 = vmatpush1.bf16.msra.mxu0 0
    %86 = vmatprep.subr.bf16.mxu0 0
    %87 = vmatpush1.bf16.msra.mxu0 0
    %88 = vmatprep.subr.bf16.mxu0 0
    %89 = vmatpush1.bf16.msra.mxu0 0
    %90 = vmatprep.subr.bf16.mxu0 0
    %91 = vmatpush1.bf16.msra.mxu0 0
    %92 = vmatprep.subr.bf16.mxu0 0
    %93 = vmatpush1.bf16.msra.mxu0 0
    %94 = vmatprep.subr.bf16.mxu0 0
    %95 = vmatpush1.bf16.msra.mxu0 0
    %96 = vmatprep.subr.bf16.mxu0 0
    %97 = vmatpush1.bf16.msra.mxu0 %v76
    %98 = vmatprep.subr.bf16.mxu0 0
    %99 = vmatpush2.bf16.msra.mxu0 0
    %100 = vmatprep.subr.bf16.mxu0 0
    %101 = vmatpush2.bf16.msra.mxu0 0
    %102 = vmatprep.subr.bf16.mxu0 0
    %103 = vmatpush2.bf16.msra.mxu0 0
    %104 = vmatprep.subr.bf16.mxu0 0
    %105 = vmatpush2.bf16.msra.mxu0 0
    %106 = vmatprep.subr.bf16.mxu0 0
    %107 = vmatpush2.bf16.msra.mxu0 0
    %108 = vmatprep.subr.bf16.mxu0 0
    %109 = vmatpush2.bf16.msra.mxu0 0
    %110 = vmatprep.subr.bf16.mxu0 0
    %111 = vmatpush2.bf16.msra.mxu0 0
    %112 = vmatprep.subr.bf16.mxu0 0
    %113 = vmatpush2.bf16.msra.mxu0 0
    %114 = vmatprep.mubr.bf16.mxu0 0
    %115 = vmatmul.mubr.bf16.gmra.mxu0 %v80
    %v116 = vpop.f32.mrf.mxu0
    %v117 = vadd.f32 %v70, %v116
    %v118 = vpop.f32.mrf.mxu0
    %v119 = vpop.f32.mrf.mxu0
    %v120 = vadd.f32 %v70, %v119
    %v121 = vpop.f32.mrf.mxu0
    %122 = vdwg.mxu0
    %v123 = vld [vmem:[#allocation7] sm:$0xf]
    %v124 = vld [vmem:[#allocation7 + $0x4] sm:$0xf]
    %v125 = vld [vmem:[#allocation7 + $0x8] sm:$0xf]
    %v126 = vld [vmem:[#allocation7 + $0xc] sm:$0xf]
    %v131 = vunpack.c.l.b16 %v123
    %v132 = vunpack.c.l.b16 %v124
    %v133 = vunpack.c.l.b16 %v125
    %v134 = vunpack.c.l.b16 %v126
    %v135 = vpack.c.b16 %v132, %v131
    %v136 = vpack.c.b16 %v134, %v133
    %vm139 = vcmask 261120
    %v141 = vsel %vm139, 0, 0
    %143 = vmatprep.subr.bf16.mxu0 0
    %144 = vmatpush1.bf16.msra.mxu0 0
    %145 = vmatprep.subr.bf16.mxu0 0
    %146 = vmatpush1.bf16.msra.mxu0 0
    %147 = vmatprep.subr.bf16.mxu0 0
    %148 = vmatpush1.bf16.msra.mxu0 0
    %149 = vmatprep.subr.bf16.mxu0 0
    %150 = vmatpush1.bf16.msra.mxu0 0
    %151 = vmatprep.subr.bf16.mxu0 0
    %152 = vmatpush1.bf16.msra.mxu0 0
    %153 = vmatprep.subr.bf16.mxu0 0
    %154 = vmatpush1.bf16.msra.mxu0 0
    %155 = vmatprep.subr.bf16.mxu0 0
    %156 = vmatpush1.bf16.msra.mxu0 %v136
    %157 = vmatprep.subr.bf16.mxu0 0
    %158 = vmatpush1.bf16.msra.mxu0 %v135
    %159 = vmatprep.subr.bf16.mxu0 0
    %160 = vmatpush2.bf16.msra.mxu0 0
    %161 = vmatprep.subr.bf16.mxu0 0
    %162 = vmatpush2.bf16.msra.mxu0 0
    %163 = vmatprep.subr.bf16.mxu0 0
    %164 = vmatpush2.bf16.msra.mxu0 0
    %165 = vmatprep.subr.bf16.mxu0 0
    %166 = vmatpush2.bf16.msra.mxu0 0
    %167 = vmatprep.subr.bf16.mxu0 0
    %168 = vmatpush2.bf16.msra.mxu0 0
    %169 = vmatprep.subr.bf16.mxu0 0
    %170 = vmatpush2.bf16.msra.mxu0 0
    %171 = vmatprep.subr.bf16.mxu0 0
    %172 = vmatpush2.bf16.msra.mxu0 0
    %173 = vmatprep.subr.bf16.mxu0 0
    %174 = vmatpush2.bf16.msra.mxu0 0
    %175 = vmatprep.mubr.bf16.mxu0 0
    %176 = vmatmul.mubr.bf16.gmra.mxu0 %v141
    %v177 = vpop.f32.mrf.mxu0
    %v178 = vadd.f32 0.0, %v177
    %v179 = vpop.f32.mrf.mxu0
    %v180 = vpop.f32.mrf.mxu0
    %v181 = vpop.f32.mrf.mxu0
    %182 = vdwg.mxu0
    %v183 = vadd.f32 %v117, %v178
    %v184 = vxor.u32 %v183, 2147483648
    %v185 = vmul.f32 %v184, 1.442695
    %v186 = vpow.pop %v185
    %v187 = vadd.f32 %v186, 1.0
    %v188 = vrcp.pop %v187
    %v189 = vmul.f32 1.0, %v188
    %v190 = vtanh.pop %v183
    %v191 = vmul.f32 %v189, 0.0
    %193 = vrot.lane.b32.xlu0 %v190, 64
    %v194 = vpop.permute.xlu0 %193
    %v196 = vmul.f32 %v189, %v194
    %198 = vrot.lane.b32.xlu0 %v196, 32
    %v199 = vpop.permute.xlu0 %198
    %v201 = vadd.f32 %v191, %v199
    %v202 = vtanh.pop %v201
    %204 = vrot.lane.b32.xlu0 %v202, 64
    %v205 = vpop.permute.xlu0 %204
    %v207 = vmul.f32 %v189, %v205
    %v208 = vpack.c.bf16 %v207, %v207
    %210 = vrot.lane.b32.xlu0 %v208, 32
    %v211 = vpop.permute.xlu0 %210
    %v213 = vsel %vm139, %v211, 0
    %215 = vmatprep.subr.bf16.mxu0 0
    %216 = vmatpush1.bf16.msra.mxu0 0
    %217 = vmatprep.subr.bf16.mxu0 0
    %218 = vmatpush1.bf16.msra.mxu0 0
    %219 = vmatprep.subr.bf16.mxu0 0
    %220 = vmatpush1.bf16.msra.mxu0 0
    %221 = vmatprep.subr.bf16.mxu0 0
    %222 = vmatpush1.bf16.msra.mxu0 0
    %223 = vmatprep.subr.bf16.mxu0 0
    %224 = vmatpush1.bf16.msra.mxu0 0
    %225 = vmatprep.subr.bf16.mxu0 0
    %226 = vmatpush1.bf16.msra.mxu0 0
    %227 = vmatprep.subr.bf16.mxu0 0
    %228 = vmatpush1.bf16.msra.mxu0 %v136
    %229 = vmatprep.subr.bf16.mxu0 0
    %230 = vmatpush1.bf16.msra.mxu0 %v135
    %231 = vmatprep.subr.bf16.mxu0 0
    %232 = vmatpush2.bf16.msra.mxu0 0
    %233 = vmatprep.subr.bf16.mxu0 0
    %234 = vmatpush2.bf16.msra.mxu0 0
    %235 = vmatprep.subr.bf16.mxu0 0
    %236 = vmatpush2.bf16.msra.mxu0 0
    %237 = vmatprep.subr.bf16.mxu0 0
    %238 = vmatpush2.bf16.msra.mxu0 0
    %239 = vmatprep.subr.bf16.mxu0 0
    %240 = vmatpush2.bf16.msra.mxu0 0
    %241 = vmatprep.subr.bf16.mxu0 0
    %242 = vmatpush2.bf16.msra.mxu0 0
    %243 = vmatprep.subr.bf16.mxu0 0
    %244 = vmatpush2.bf16.msra.mxu0 0
    %245 = vmatprep.subr.bf16.mxu0 0
    %246 = vmatpush2.bf16.msra.mxu0 0
    %247 = vmatprep.mubr.bf16.mxu0 0
    %248 = vmatmul.mubr.bf16.gmra.mxu0 %v213
    %v249 = vpop.f32.mrf.mxu0
    %v250 = vadd.f32 0.0, %v249
    %v251 = vpop.f32.mrf.mxu0
    %v252 = vpop.f32.mrf.mxu0
    %v253 = vpop.f32.mrf.mxu0
    %254 = vdwg.mxu0
    %v256 = vrot.slane %v250, 6
    %v258 = vadd.f32 %v117, %v256
    %v259 = vxor.u32 %v258, 2147483648
    %v260 = vmul.f32 %v259, 1.442695
    %v261 = vpow.pop %v260
    %v262 = vadd.f32 %v261, 1.0
    %v263 = vrcp.pop %v262
    %v264 = vmul.f32 1.0, %v263
    %v265 = vtanh.pop %v258
    %v267 = vrot.slane %v201, 6
    %v269 = vmul.f32 %v264, %v267
    %271 = vrot.lane.b32.xlu0 %v265, 64
    %v272 = vpop.permute.xlu0 %271
    %v274 = vmul.f32 %v264, %v272
    %276 = vrot.lane.b32.xlu0 %v274, 32
    %v277 = vpop.permute.xlu0 %276
    %v279 = vadd.f32 %v269, %v277
    %v280 = vtanh.pop %v279
    %282 = vrot.lane.b32.xlu0 %v280, 64
    %v283 = vpop.permute.xlu0 %282
    %v285 = vmul.f32 %v264, %v283
    %v286 = vpack.c.bf16 %v285, %v285
    %v288 = vrot.slane %v286, 1
    %289 = vrot.lane.b32.xlu0 %v288, 32
    %v290 = vpop.permute.xlu0 %289
    %v292 = vsel %vm139, %v290, 0
    %294 = vmatprep.subr.bf16.mxu0 0
    %295 = vmatpush1.bf16.msra.mxu0 0
    %296 = vmatprep.subr.bf16.mxu0 0
    %297 = vmatpush1.bf16.msra.mxu0 0
    %298 = vmatprep.subr.bf16.mxu0 0
    %299 = vmatpush1.bf16.msra.mxu0 0
    %300 = vmatprep.subr.bf16.mxu0 0
    %301 = vmatpush1.bf16.msra.mxu0 0
    %302 = vmatprep.subr.bf16.mxu0 0
    %303 = vmatpush1.bf16.msra.mxu0 0
    %304 = vmatprep.subr.bf16.mxu0 0
    %305 = vmatpush1.bf16.msra.mxu0 0
    %306 = vmatprep.subr.bf16.mxu0 0
    %307 = vmatpush1.bf16.msra.mxu0 %v136
    %308 = vmatprep.subr.bf16.mxu0 0
    %309 = vmatpush1.bf16.msra.mxu0 %v135
    %310 = vmatprep.subr.bf16.mxu0 0
    %311 = vmatpush2.bf16.msra.mxu0 0
    %312 = vmatprep.subr.bf16.mxu0 0
    %313 = vmatpush2.bf16.msra.mxu0 0
    %314 = vmatprep.subr.bf16.mxu0 0
    %315 = vmatpush2.bf16.msra.mxu0 0
    %316 = vmatprep.subr.bf16.mxu0 0
    %317 = vmatpush2.bf16.msra.mxu0 0
    %318 = vmatprep.subr.bf16.mxu0 0
    %319 = vmatpush2.bf16.msra.mxu0 0
    %320 = vmatprep.subr.bf16.mxu0 0
    %321 = vmatpush2.bf16.msra.mxu0 0
    %322 = vmatprep.subr.bf16.mxu0 0
    %323 = vmatpush2.bf16.msra.mxu0 0
    %324 = vmatprep.subr.bf16.mxu0 0
    %325 = vmatpush2.bf16.msra.mxu0 0
    %326 = vmatprep.mubr.bf16.mxu0 0
    %327 = vmatmul.mubr.bf16.gmra.mxu0 %v292
    %v328 = vpop.f32.mrf.mxu0
    %v329 = vadd.f32 0.0, %v328
    %v330 = vpop.f32.mrf.mxu0
    %v331 = vpop.f32.mrf.mxu0
    %v332 = vpop.f32.mrf.mxu0
    %333 = vdwg.mxu0
    %v335 = vrot.slane %v329, 4
    %v337 = vadd.f32 %v117, %v335
    %v338 = vxor.u32 %v337, 2147483648
    %v339 = vmul.f32 %v338, 1.442695
    %v340 = vpow.pop %v339
    %v341 = vadd.f32 %v340, 1.0
    %v342 = vrcp.pop %v341
    %v343 = vmul.f32 1.0, %v342
    %v344 = vtanh.pop %v337
    %v346 = vrot.slane %v279, 6
    %v348 = vmul.f32 %v343, %v346
    %350 = vrot.lane.b32.xlu0 %v344, 64
    %v351 = vpop.permute.xlu0 %350
    %v353 = vmul.f32 %v343, %v351
    %355 = vrot.lane.b32.xlu0 %v353, 32
    %v356 = vpop.permute.xlu0 %355
    %v358 = vadd.f32 %v348, %v356
    %v359 = vtanh.pop %v358
    %361 = vrot.lane.b32.xlu0 %v359, 64
    %v362 = vpop.permute.xlu0 %361
    %v364 = vmul.f32 %v343, %v362
    %v365 = vpack.c.bf16 %v364, %v364
    %v367 = vrot.slane %v365, 2
    %368 = vrot.lane.b32.xlu0 %v367, 32
    %v369 = vpop.permute.xlu0 %368
    %v371 = vsel %vm139, %v369, 0
    %373 = vmatprep.subr.bf16.mxu0 0
    %374 = vmatpush1.bf16.msra.mxu0 0
    %375 = vmatprep.subr.bf16.mxu0 0
    %376 = vmatpush1.bf16.msra.mxu0 0
    %377 = vmatprep.subr.bf16.mxu0 0
    %378 = vmatpush1.bf16.msra.mxu0 0
    %379 = vmatprep.subr.bf16.mxu0 0
    %380 = vmatpush1.bf16.msra.mxu0 0
    %381 = vmatprep.subr.bf16.mxu0 0
    %382 = vmatpush1.bf16.msra.mxu0 0
    %383 = vmatprep.subr.bf16.mxu0 0
    %384 = vmatpush1.bf16.msra.mxu0 0
    %385 = vmatprep.subr.bf16.mxu0 0
    %386 = vmatpush1.bf16.msra.mxu0 %v136
    %387 = vmatprep.subr.bf16.mxu0 0
    %388 = vmatpush1.bf16.msra.mxu0 %v135
    %389 = vmatprep.subr.bf16.mxu0 0
    %390 = vmatpush2.bf16.msra.mxu0 0
    %391 = vmatprep.subr.bf16.mxu0 0
    %392 = vmatpush2.bf16.msra.mxu0 0
    %393 = vmatprep.subr.bf16.mxu0 0
    %394 = vmatpush2.bf16.msra.mxu0 0
    %395 = vmatprep.subr.bf16.mxu0 0
    %396 = vmatpush2.bf16.msra.mxu0 0
    %397 = vmatprep.subr.bf16.mxu0 0
    %398 = vmatpush2.bf16.msra.mxu0 0
    %399 = vmatprep.subr.bf16.mxu0 0
    %400 = vmatpush2.bf16.msra.mxu0 0
    %401 = vmatprep.subr.bf16.mxu0 0
    %402 = vmatpush2.bf16.msra.mxu0 0
    %403 = vmatprep.subr.bf16.mxu0 0
    %404 = vmatpush2.bf16.msra.mxu0 0
    %405 = vmatprep.mubr.bf16.mxu0 0
    %406 = vmatmul.mubr.bf16.gmra.mxu0 %v371
    %v407 = vpop.f32.mrf.mxu0
    %v408 = vadd.f32 0.0, %v407
    %v409 = vpop.f32.mrf.mxu0
    %v410 = vpop.f32.mrf.mxu0
    %v411 = vpop.f32.mrf.mxu0
    %412 = vdwg.mxu0
    %v414 = vrot.slane %v408, 2
    %v416 = vadd.f32 %v117, %v414
    %v417 = vxor.u32 %v416, 2147483648
    %v418 = vmul.f32 %v417, 1.442695
    %v419 = vpow.pop %v418
    %v420 = vadd.f32 %v419, 1.0
    %v421 = vrcp.pop %v420
    %v422 = vmul.f32 1.0, %v421
    %v423 = vtanh.pop %v416
    %v425 = vrot.slane %v358, 6
    %v427 = vmul.f32 %v422, %v425
    %429 = vrot.lane.b32.xlu0 %v423, 64
    %v430 = vpop.permute.xlu0 %429
    %v432 = vmul.f32 %v422, %v430
    %434 = vrot.lane.b32.xlu0 %v432, 32
    %v435 = vpop.permute.xlu0 %434
    %v437 = vadd.f32 %v427, %v435
    %v438 = vtanh.pop %v437
    %440 = vrot.lane.b32.xlu0 %v438, 64
    %v441 = vpop.permute.xlu0 %440
    %v443 = vmul.f32 %v422, %v441
    %v444 = vpack.c.bf16 %v443, %v443
    %v446 = vrot.slane %v444, 3
    %447 = vrot.lane.b32.xlu0 %v446, 32
    %v448 = vpop.permute.xlu0 %447
    %v450 = vsel %vm139, %v448, 0
    %452 = vmatprep.subr.bf16.mxu0 0
    %453 = vmatpush1.bf16.msra.mxu0 0
    %454 = vmatprep.subr.bf16.mxu0 0
    %455 = vmatpush1.bf16.msra.mxu0 0
    %456 = vmatprep.subr.bf16.mxu0 0
    %457 = vmatpush1.bf16.msra.mxu0 0
    %458 = vmatprep.subr.bf16.mxu0 0
    %459 = vmatpush1.bf16.msra.mxu0 0
    %460 = vmatprep.subr.bf16.mxu0 0
    %461 = vmatpush1.bf16.msra.mxu0 0
    %462 = vmatprep.subr.bf16.mxu0 0
    %463 = vmatpush1.bf16.msra.mxu0 0
    %464 = vmatprep.subr.bf16.mxu0 0
    %465 = vmatpush1.bf16.msra.mxu0 %v136
    %466 = vmatprep.subr.bf16.mxu0 0
    %467 = vmatpush1.bf16.msra.mxu0 %v135
    %468 = vmatprep.subr.bf16.mxu0 0
    %469 = vmatpush2.bf16.msra.mxu0 0
    %470 = vmatprep.subr.bf16.mxu0 0
    %471 = vmatpush2.bf16.msra.mxu0 0
    %472 = vmatprep.subr.bf16.mxu0 0
    %473 = vmatpush2.bf16.msra.mxu0 0
    %474 = vmatprep.subr.bf16.mxu0 0
    %475 = vmatpush2.bf16.msra.mxu0 0
    %476 = vmatprep.subr.bf16.mxu0 0
    %477 = vmatpush2.bf16.msra.mxu0 0
    %478 = vmatprep.subr.bf16.mxu0 0
    %479 = vmatpush2.bf16.msra.mxu0 0
    %480 = vmatprep.subr.bf16.mxu0 0
    %481 = vmatpush2.bf16.msra.mxu0 0
    %482 = vmatprep.subr.bf16.mxu0 0
    %483 = vmatpush2.bf16.msra.mxu0 0
    %484 = vmatprep.mubr.bf16.mxu0 0
    %485 = vmatmul.mubr.bf16.gmra.mxu0 %v450
    %v486 = vpop.f32.mrf.mxu0
    %v487 = vadd.f32 0.0, %v486
    %v488 = vpop.f32.mrf.mxu0
    %v489 = vpop.f32.mrf.mxu0
    %v490 = vpop.f32.mrf.mxu0
    %491 = vdwg.mxu0
    %v492 = vadd.f32 %v120, %v487
    %v493 = vxor.u32 %v492, 2147483648
    %v494 = vmul.f32 %v493, 1.442695
    %v495 = vpow.pop %v494
    %v496 = vadd.f32 %v495, 1.0
    %v497 = vrcp.pop %v496
    %v498 = vmul.f32 1.0, %v497
    %v499 = vtanh.pop %v492
    %v501 = vrot.slane %v437, 6
    %v503 = vmul.f32 %v498, %v501
    %505 = vrot.lane.b32.xlu0 %v499, 64
    %v506 = vpop.permute.xlu0 %505
    %v508 = vmul.f32 %v498, %v506
    %510 = vrot.lane.b32.xlu0 %v508, 32
    %v511 = vpop.permute.xlu0 %510
    %v513 = vadd.f32 %v503, %v511
    %v514 = vtanh.pop %v513
    %516 = vrot.lane.b32.xlu0 %v514, 64
    %v517 = vpop.permute.xlu0 %516
    %v519 = vmul.f32 %v498, %v517
    %v520 = vpack.c.bf16 %v519, %v519
    %522 = vrot.lane.b32.xlu0 %v520, 32
    %v523 = vpop.permute.xlu0 %522
    %v525 = vsel %vm139, %v523, 0
    %527 = vmatprep.subr.bf16.mxu0 0
    %528 = vmatpush1.bf16.msra.mxu0 0
    %529 = vmatprep.subr.bf16.mxu0 0
    %530 = vmatpush1.bf16.msra.mxu0 0
    %531 = vmatprep.subr.bf16.mxu0 0
    %532 = vmatpush1.bf16.msra.mxu0 0
    %533 = vmatprep.subr.bf16.mxu0 0
    %534 = vmatpush1.bf16.msra.mxu0 0
    %535 = vmatprep.subr.bf16.mxu0 0
    %536 = vmatpush1.bf16.msra.mxu0 0
    %537 = vmatprep.subr.bf16.mxu0 0
    %538 = vmatpush1.bf16.msra.mxu0 0
    %539 = vmatprep.subr.bf16.mxu0 0
    %540 = vmatpush1.bf16.msra.mxu0 %v136
    %541 = vmatprep.subr.bf16.mxu0 0
    %542 = vmatpush1.bf16.msra.mxu0 %v135
    %543 = vmatprep.subr.bf16.mxu0 0
    %544 = vmatpush2.bf16.msra.mxu0 0
    %545 = vmatprep.subr.bf16.mxu0 0
    %546 = vmatpush2.bf16.msra.mxu0 0
    %547 = vmatprep.subr.bf16.mxu0 0
    %548 = vmatpush2.bf16.msra.mxu0 0
    %549 = vmatprep.subr.bf16.mxu0 0
    %550 = vmatpush2.bf16.msra.mxu0 0
    %551 = vmatprep.subr.bf16.mxu0 0
    %552 = vmatpush2.bf16.msra.mxu0 0
    %553 = vmatprep.subr.bf16.mxu0 0
    %554 = vmatpush2.bf16.msra.mxu0 0
    %555 = vmatprep.subr.bf16.mxu0 0
    %556 = vmatpush2.bf16.msra.mxu0 0
    %557 = vmatprep.subr.bf16.mxu0 0
    %558 = vmatpush2.bf16.msra.mxu0 0
    %559 = vmatprep.mubr.bf16.mxu0 0
    %560 = vmatmul.mubr.bf16.gmra.mxu0 %v525
    %v561 = vpop.f32.mrf.mxu0
    %v562 = vadd.f32 0.0, %v561
    %v563 = vpop.f32.mrf.mxu0
    %v564 = vpop.f32.mrf.mxu0
    %v565 = vpop.f32.mrf.mxu0
    %566 = vdwg.mxu0
    %v568 = vrot.slane %v562, 6
    %v570 = vadd.f32 %v120, %v568
    %v571 = vxor.u32 %v570, 2147483648
    %v572 = vmul.f32 %v571, 1.442695
    %v573 = vpow.pop %v572
    %v574 = vadd.f32 %v573, 1.0
    %v575 = vrcp.pop %v574
    %v576 = vmul.f32 1.0, %v575
    %v577 = vtanh.pop %v570
    %v579 = vrot.slane %v513, 6
    %v581 = vmul.f32 %v576, %v579
    %583 = vrot.lane.b32.xlu0 %v577, 64
    %v584 = vpop.permute.xlu0 %583
    %v586 = vmul.f32 %v576, %v584
    %588 = vrot.lane.b32.xlu0 %v586, 32
    %v589 = vpop.permute.xlu0 %588
    %v591 = vadd.f32 %v581, %v589
    %v592 = vtanh.pop %v591
    %594 = vrot.lane.b32.xlu0 %v592, 64
    %v595 = vpop.permute.xlu0 %594
    %v597 = vmul.f32 %v576, %v595
    %v598 = vpack.c.bf16 %v597, %v597
    %v600 = vrot.slane %v598, 1
    %601 = vrot.lane.b32.xlu0 %v600, 32
    %v602 = vpop.permute.xlu0 %601
    %v604 = vsel %vm139, %v602, 0
    %606 = vmatprep.subr.bf16.mxu0 0
    %607 = vmatpush1.bf16.msra.mxu0 0
    %608 = vmatprep.subr.bf16.mxu0 0
    %609 = vmatpush1.bf16.msra.mxu0 0
    %610 = vmatprep.subr.bf16.mxu0 0
    %611 = vmatpush1.bf16.msra.mxu0 0
    %612 = vmatprep.subr.bf16.mxu0 0
    %613 = vmatpush1.bf16.msra.mxu0 0
    %614 = vmatprep.subr.bf16.mxu0 0
    %615 = vmatpush1.bf16.msra.mxu0 0
    %616 = vmatprep.subr.bf16.mxu0 0
    %617 = vmatpush1.bf16.msra.mxu0 0
    %618 = vmatprep.subr.bf16.mxu0 0
    %619 = vmatpush1.bf16.msra.mxu0 %v136
    %620 = vmatprep.subr.bf16.mxu0 0
    %621 = vmatpush1.bf16.msra.mxu0 %v135
    %622 = vmatprep.subr.bf16.mxu0 0
    %623 = vmatpush2.bf16.msra.mxu0 0
    %624 = vmatprep.subr.bf16.mxu0 0
    %625 = vmatpush2.bf16.msra.mxu0 0
    %626 = vmatprep.subr.bf16.mxu0 0
    %627 = vmatpush2.bf16.msra.mxu0 0
    %628 = vmatprep.subr.bf16.mxu0 0
    %629 = vmatpush2.bf16.msra.mxu0 0
    %630 = vmatprep.subr.bf16.mxu0 0
    %631 = vmatpush2.bf16.msra.mxu0 0
    %632 = vmatprep.subr.bf16.mxu0 0
    %633 = vmatpush2.bf16.msra.mxu0 0
    %634 = vmatprep.subr.bf16.mxu0 0
    %635 = vmatpush2.bf16.msra.mxu0 0
    %636 = vmatprep.subr.bf16.mxu0 0
    %637 = vmatpush2.bf16.msra.mxu0 0
    %638 = vmatprep.mubr.bf16.mxu0 0
    %639 = vmatmul.mubr.bf16.gmra.mxu0 %v604
    %v640 = vpop.f32.mrf.mxu0
    %v641 = vadd.f32 0.0, %v640
    %v642 = vpop.f32.mrf.mxu0
    %v643 = vpop.f32.mrf.mxu0
    %v644 = vpop.f32.mrf.mxu0
    %645 = vdwg.mxu0
    %v647 = vrot.slane %v641, 4
    %v649 = vadd.f32 %v120, %v647
    %v650 = vxor.u32 %v649, 2147483648
    %v651 = vmul.f32 %v650, 1.442695
    %v652 = vpow.pop %v651
    %v653 = vadd.f32 %v652, 1.0
    %v654 = vrcp.pop %v653
    %v655 = vmul.f32 1.0, %v654
    %v656 = vtanh.pop %v649
    %v658 = vrot.slane %v591, 6
    %v660 = vmul.f32 %v655, %v658
    %662 = vrot.lane.b32.xlu0 %v656, 64
    %v663 = vpop.permute.xlu0 %662
    %v665 = vmul.f32 %v655, %v663
    %667 = vrot.lane.b32.xlu0 %v665, 32
    %v668 = vpop.permute.xlu0 %667
    %v670 = vadd.f32 %v660, %v668
    %v671 = vtanh.pop %v670
    %673 = vrot.lane.b32.xlu0 %v671, 64
    %v674 = vpop.permute.xlu0 %673
    %v676 = vmul.f32 %v655, %v674
    %v677 = vpack.c.bf16 %v676, %v676
    %v679 = vrot.slane %v677, 2
    %680 = vrot.lane.b32.xlu0 %v679, 32
    %v681 = vpop.permute.xlu0 %680
    %v683 = vsel %vm139, %v681, 0
    %685 = vmatprep.subr.bf16.mxu0 0
    %686 = vmatpush1.bf16.msra.mxu0 0
    %687 = vmatprep.subr.bf16.mxu0 0
    %688 = vmatpush1.bf16.msra.mxu0 0
    %689 = vmatprep.subr.bf16.mxu0 0
    %690 = vmatpush1.bf16.msra.mxu0 0
    %691 = vmatprep.subr.bf16.mxu0 0
    %692 = vmatpush1.bf16.msra.mxu0 0
    %693 = vmatprep.subr.bf16.mxu0 0
    %694 = vmatpush1.bf16.msra.mxu0 0
    %695 = vmatprep.subr.bf16.mxu0 0
    %696 = vmatpush1.bf16.msra.mxu0 0
    %697 = vmatprep.subr.bf16.mxu0 0
    %698 = vmatpush1.bf16.msra.mxu0 %v136
    %699 = vmatprep.subr.bf16.mxu0 0
    %700 = vmatpush1.bf16.msra.mxu0 %v135
    %701 = vmatprep.subr.bf16.mxu0 0
    %702 = vmatpush2.bf16.msra.mxu0 0
    %703 = vmatprep.subr.bf16.mxu0 0
    %704 = vmatpush2.bf16.msra.mxu0 0
    %705 = vmatprep.subr.bf16.mxu0 0
    %706 = vmatpush2.bf16.msra.mxu0 0
    %707 = vmatprep.subr.bf16.mxu0 0
    %708 = vmatpush2.bf16.msra.mxu0 0
    %709 = vmatprep.subr.bf16.mxu0 0
    %710 = vmatpush2.bf16.msra.mxu0 0
    %711 = vmatprep.subr.bf16.mxu0 0
    %712 = vmatpush2.bf16.msra.mxu0 0
    %713 = vmatprep.subr.bf16.mxu0 0
    %714 = vmatpush2.bf16.msra.mxu0 0
    %715 = vmatprep.subr.bf16.mxu0 0
    %716 = vmatpush2.bf16.msra.mxu0 0
    %717 = vmatprep.mubr.bf16.mxu0 0
    %718 = vmatmul.mubr.bf16.gmra.mxu0 %v683
    %v719 = vpop.f32.mrf.mxu0
    %v720 = vadd.f32 0.0, %v719
    %v721 = vpop.f32.mrf.mxu0
    %v722 = vpop.f32.mrf.mxu0
    %v723 = vpop.f32.mrf.mxu0
    %724 = vdwg.mxu0
    %v726 = vrot.slane %v720, 2
    %v728 = vadd.f32 %v120, %v726
    %v729 = vxor.u32 %v728, 2147483648
    %v730 = vmul.f32 %v729, 1.442695
    %v731 = vpow.pop %v730
    %v732 = vadd.f32 %v731, 1.0
    %v733 = vrcp.pop %v732
    %v734 = vmul.f32 1.0, %v733
    %v735 = vtanh.pop %v728
    %v737 = vrot.slane %v670, 6
    %v739 = vmul.f32 %v734, %v737
    %741 = vrot.lane.b32.xlu0 %v735, 64
    %v742 = vpop.permute.xlu0 %741
    %v744 = vmul.f32 %v734, %v742
    %746 = vrot.lane.b32.xlu0 %v744, 32
    %v747 = vpop.permute.xlu0 %746
    %v749 = vadd.f32 %v739, %v747
    %v750 = vtanh.pop %v749
    %752 = vrot.lane.b32.xlu0 %v750, 64
    %v753 = vpop.permute.xlu0 %752
    %v755 = vmul.f32 %v734, %v753
    %vm756 = vcmask 1041408
    %v757 = vsel %vm756, %v207, %v285
    %vm758 = vcmask 1043456
    %v759 = vsel %vm758, %v757, %v364
    %vm760 = vcmask 1045504
    %v761 = vsel %vm760, %v759, %v443
    %v762 = vsel %vm756, %v519, %v597
    %v763 = vsel %vm758, %v762, %v676
    %v764 = vsel %vm760, %v763, %v755
    %767 = vrot.lane.b32.xlu0 %v761, 32
    %v768 = vpop.permute.xlu0 %767
    %769 = vrot.lane.b32.xlu0 %v764, 32
    %v770 = vpop.permute.xlu0 %769
    %773 = vst.msk [vmem:[#allocation8] sm:$0xff] %vm139, %v768
    %774 = vst.msk [vmem:[#allocation8 + $0x8] sm:$0xff] %vm139, %v770
    // Predicated region
    $region30: #{rnn_module_forward.1} parent=1 // pred_check
      _
    $region31: #{rnn_module_forward.1} parent=1 // pred_check_branch
      %776 = sbr.rel (0) target = $region33
    $region32: #{rnn_module_forward.1} parent=1 // pred_region
      %s778 = ssub.s32 256, 256
      %779 = vsyncadd [#allocation4], %s778
      %s780 = sshll.u32 [#allocation8], 4
      %s781 = int_to_ptr.vmem [resolvable:$true] %s780
      %786 = dma.vmem_to_hbm [thread:$0]  %s781, 256, %s4, [#allocation4], 128, 128, 8
    $region33: #{rnn_module_forward.1} parent=1 // pred_fallthru
      _
    // Predicated region
    $region34: #{rnn_module_forward.1} parent=1 // pred_check
      _
    $region35: #{rnn_module_forward.1} parent=1 // pred_check_branch
      %788 = sbr.rel (0) target = $region37
    $region36: #{rnn_module_forward.1} parent=1 // pred_region
      %789 = dma.done [#allocation4], 256
    $region37: #{rnn_module_forward.1} parent=1 // pred_fallthru
      _
    %790 = vsyncpa [#allocation3], 1
    %791 = vsyncpa [#allocation6], 1
    %792 = vsyncpa [#allocation4], 1

</llo_original>
